<compile_context>
chip_gen: v6e
topology: v6e:2x2x1
jax: 0.10.0
libtpu: 0.0.40
codegen_flags: <defaults>
</compile_context>

<pallas_src>
import functools

import jax
import jax.numpy as jnp
from jax.experimental import pallas as pl
from jax.experimental.pallas import tpu as pltpu


# ---------------------------------------------------------------------------
# Fused single-pass kernel: whole sample(s) per grid step.
# ---------------------------------------------------------------------------
def _se_fused_kernel(x_ref, w1_ref, w2_ref, o_ref, *, inv_hw):
    # x_ref: (Bt, HW, C), input dtype; C on lanes, HW on sublanes.
    x = x_ref[...]

    # AdaptiveAvgPool2d(1): f32-accumulated spatial sum, scaled by 1/HW.
    pooled = jnp.sum(x, axis=1, dtype=jnp.float32) * inv_hw          # (Bt, C)

    # fc1 (no bias) + ReLU, fc2 (no bias) + Hsigmoid.  Tiny; stays in f32.
    h = jnp.dot(pooled, w1_ref[...].astype(jnp.float32),
                preferred_element_type=jnp.float32)                  # (Bt, Cr)
    h = jnp.maximum(h, 0.0)
    y = jnp.dot(h, w2_ref[...].astype(jnp.float32),
                preferred_element_type=jnp.float32)                  # (Bt, C)
    y = jnp.clip(y + 3.0, 0.0, 6.0) * (1.0 / 6.0)

    # Scale in the input dtype (no full-tensor f32 upcast of x).
    o_ref[...] = (x * y[:, None, :].astype(x.dtype)).astype(o_ref.dtype)


# ---------------------------------------------------------------------------
# Two-pass path for large feature maps.
# ---------------------------------------------------------------------------
def _se_pool_fc_kernel(x_ref, w1_ref, w2_ref, y_ref, acc_ref, *, inv_hw):
    # Grid: (B, n_hw); the HW axis is the (last) reduction axis.
    h_idx = pl.program_id(1)

    @pl.when(h_idx == 0)
    def _():
        acc_ref[...] = jnp.zeros_like(acc_ref)

    # f32-accumulated partial spatial sum of this HW tile.
    acc_ref[...] += jnp.sum(x_ref[...], axis=1, dtype=jnp.float32)   # (1, C)

    @pl.when(h_idx == pl.num_programs(1) - 1)
    def _():
        pooled = acc_ref[...] * inv_hw                               # (1, C)
        h = jnp.maximum(
            jnp.dot(pooled, w1_ref[...].astype(jnp.float32),
                    preferred_element_type=jnp.float32), 0.0)        # (1, Cr)
        y = jnp.dot(h, w2_ref[...].astype(jnp.float32),
                    preferred_element_type=jnp.float32)              # (1, C)
        y = jnp.clip(y + 3.0, 0.0, 6.0) * (1.0 / 6.0)
        y_ref[...] = y[:, None, :]                                   # (1,1,C) f32


def _se_scale_kernel(x_ref, y_ref, o_ref):
    x = x_ref[...]                           # (1, hw_t, C), input dtype
    y = y_ref[...].astype(x.dtype)           # (1, 1, C)
    o_ref[...] = (x * y).astype(o_ref.dtype)


# ---------------------------------------------------------------------------
# Wrapper
# ---------------------------------------------------------------------------
def se_module(x, w1, w2, *, max_tile_bytes=2 * 1024 * 1024):
    """MobileNetV3 SEModule forward.

    x: [B, C, H, W] (PyTorch NCHW); w1: [C, C//r]; w2: [C//r, C] (the two
    bias-free Linear weights stored as (in, out)).  Returns [B, C, H, W].
    """
    B, C, H, W = x.shape
    HW = H * W
    Cr = w1.shape[1]
    itemsize = jnp.dtype(x.dtype).itemsize

    # Lane-dense layout: NHWC-flat [B, HW, C] puts C on lanes.  (In an NHWC
    # model this transpose disappears; here it is wrapper-side layout plumbing.)
    x_nhwc = jnp.transpose(x, (0, 2, 3, 1)).reshape(B, HW, C)

    w_bytes = (w1.size + w2.size) * jnp.dtype(w1.dtype).itemsize
    per_sample_bytes = HW * C * itemsize
    fc_flops = 2 * B * C * Cr * 2

    if per_sample_bytes <= max_tile_bytes:
        # ---- fused single pass, tiled (and megacore-parallel) over batch ----
        bt = 1
        for cand in range(B, 0, -1):
            if B % cand == 0 and cand * per_sample_bytes <= max_tile_bytes:
                bt = cand
                break
        kernel = functools.partial(_se_fused_kernel, inv_hw=1.0 / HW)
        out_nhwc = pl.pallas_call(
            kernel,
            out_shape=jax.ShapeDtypeStruct((B, HW, C), x.dtype),
            grid=(B // bt,),
            in_specs=[
                pl.BlockSpec((bt, HW, C), lambda b: (b, 0, 0)),
                pl.BlockSpec(w1.shape, lambda b: (0, 0)),
                pl.BlockSpec(w2.shape, lambda b: (0, 0)),
            ],
            out_specs=pl.BlockSpec((bt, HW, C), lambda b: (b, 0, 0)),
            compiler_params=pltpu.CompilerParams(
                dimension_semantics=("parallel",)),
            cost_estimate=pl.CostEstimate(
                flops=2 * B * HW * C + fc_flops,
                transcendentals=0,
                bytes_accessed=2 * B * HW * C * itemsize + w_bytes),
        )(x_nhwc, w1, w2)
    else:
        # ---- two-pass streaming over HW tiles (bounded VMEM everywhere) ----
        hw_t = HW
        for cand in range(HW, 0, -1):
            if (HW % cand == 0 and cand % 8 == 0
                    and cand * C * itemsize <= max_tile_bytes):
                hw_t = cand
                break
        n_hw = HW // hw_t

        # Pass 1: spatial-sum accumulation per sample; FC1/ReLU/FC2/hsigmoid
        # run once (on the last HW tile) -> per-channel scale y [B, 1, C] f32.
        pool_kernel = functools.partial(_se_pool_fc_kernel, inv_hw=1.0 / HW)
        y = pl.pallas_call(
            pool_kernel,
            out_shape=jax.ShapeDtypeStruct((B, 1, C), jnp.float32),
            grid=(B, n_hw),
            in_specs=[
                pl.BlockSpec((1, hw_t, C), lambda b, h: (b, h, 0)),
                pl.BlockSpec(w1.shape, lambda b, h: (0, 0)),
                pl.BlockSpec(w2.shape, lambda b, h: (0, 0)),
            ],
            out_specs=pl.BlockSpec((1, 1, C), lambda b, h: (b, 0, 0)),
            scratch_shapes=[pltpu.VMEM((1, C), jnp.float32)],
            compiler_params=pltpu.CompilerParams(
                dimension_semantics=("parallel", "arbitrary")),
            cost_estimate=pl.CostEstimate(
                flops=B * HW * C + fc_flops,
                transcendentals=0,
                bytes_accessed=B * HW * C * itemsize + w_bytes + B * C * 4),
        )(x_nhwc, w1, w2)

        # Pass 2: re-stream x tiles and apply the per-channel scale.
        out_nhwc = pl.pallas_call(
            _se_scale_kernel,
            out_shape=jax.ShapeDtypeStruct((B, HW, C), x.dtype),
            grid=(B, n_hw),
            in_specs=[
                pl.BlockSpec((1, hw_t, C), lambda b, h: (b, h, 0)),
                pl.BlockSpec((1, 1, C), lambda b, h: (b, 0, 0)),
            ],
            out_specs=pl.BlockSpec((1, hw_t, C), lambda b, h: (b, h, 0)),
            compiler_params=pltpu.CompilerParams(
                dimension_semantics=("parallel", "parallel")),
            cost_estimate=pl.CostEstimate(
                flops=B * HW * C,
                transcendentals=0,
                bytes_accessed=2 * B * HW * C * itemsize + B * C * 4),
        )(x_nhwc, y)

    return out_nhwc.reshape(B, H, W, C).transpose(0, 3, 1, 2)


def se_reference(x, w1, w2):
    # Pure-JAX reference matching PyTorch SEModule.forward semantics.
    pooled = jnp.mean(x, axis=(2, 3))                       # (B, C)
    h = jnp.maximum(pooled @ w1, 0.0)                       # (B, Cr)
    y = jnp.clip(h @ w2 + 3.0, 0.0, 6.0) / 6.0              # (B, C)
    return x * y[:, :, None, None]


if __name__ == "__main__":
    key = jax.random.PRNGKey(0)
    B, C, H, W = 2, 32, 8, 8
    reduction = 4
    Cr = C // reduction

    kx, k1, k2 = jax.random.split(key, 3)
    x = jax.random.normal(kx, (B, C, H, W), dtype=jnp.float32)
    # nn.Linear(channel, channel//reduction, bias=False).weight is (out, in);
    # store transposed (in, out) so the kernels compute pooled @ w.
    w1 = (jax.random.normal(k1, (Cr, C), dtype=jnp.float32) * 0.1).T   # (C, Cr)
    w2 = (jax.random.normal(k2, (C, Cr), dtype=jnp.float32) * 0.1).T   # (Cr, C)

    ref = se_reference(x, w1, w2)

    # Fused single-pass path (default VMEM budget).
    out = se_module(x, w1, w2)
    jax.block_until_ready(out)
    assert jnp.allclose(out, ref, atol=1e-5, rtol=1e-5), "fused path mismatch"

    # Force the two-pass streaming path (tiny tile budget) to exercise it too.
    out2 = se_module(x, w1, w2, max_tile_bytes=4096)
    jax.block_until_ready(out2)
    assert jnp.allclose(out2, ref, atol=1e-5, rtol=1e-5), "two-pass mismatch"

    print("KERNEL_OK")
</pallas_src>

<mosaic_0001>
module attributes {stable_mosaic.version = 11 : i64} {
  func.func @_se_fused_kernel(%arg0: i32, %arg1: memref<2x64x32xf32, #tpu.memory_space<vmem>>, %arg2: memref<32x8xf32, #tpu.memory_space<vmem>>, %arg3: memref<8x32xf32, #tpu.memory_space<vmem>>, %arg4: memref<2x64x32xf32, #tpu.memory_space<vmem>>) attributes {dimension_semantics = [#tpu.dimension_semantics<parallel>], iteration_bounds = array<i64: 1>, scalar_prefetch = 0 : i64, scratch_operands = 0 : i64, tpu.core_type = #tpu.core_type<tc>, window_params = [{transform_indices = @transform_0, window_bounds = array<i64: 2, 64, 32>}, {pipeline_mode = #tpu.pipeline_mode<synchronous>, transform_indices = @transform_1, window_bounds = array<i64: 32, 8>}, {pipeline_mode = #tpu.pipeline_mode<synchronous>, transform_indices = @transform_2, window_bounds = array<i64: 8, 32>}, {transform_indices = @transform_3, window_bounds = array<i64: 2, 64, 32>}]} {
    %c0 = arith.constant 0 : index
    %c0_0 = arith.constant 0 : index
    %c0_1 = arith.constant 0 : index
    %0 = vector.load %arg1[%c0, %c0_0, %c0_1] : memref<2x64x32xf32, #tpu.memory_space<vmem>>, vector<2x64x32xf32>
    %cst = arith.constant dense<0.000000e+00> : vector<2x32xf32>
    %1 = vector.multi_reduction <add>, %0, %cst [1] : vector<2x64x32xf32> to vector<2x32xf32>
    %cst_2 = arith.constant 1.562500e-02 : f32
    %2 = vector.broadcast %cst_2 : f32 to vector<2x32xf32>
    %3 = arith.mulf %1, %2 : vector<2x32xf32>
    %c0_3 = arith.constant 0 : index
    %c0_4 = arith.constant 0 : index
    %4 = vector.load %arg2[%c0_3, %c0_4] : memref<32x8xf32, #tpu.memory_space<vmem>>, vector<32x8xf32>
    %cst_5 = arith.constant dense<0.000000e+00> : vector<2x8xf32>
    %5 = tpu.matmul %3, %4, %cst_5 {dimension_numbers = #tpu.dot_dimension_numbers<[1], [0], [0], [1], [0, 0, 1, 1], [], []>} : vector<2x32xf32>, vector<32x8xf32>, vector<2x8xf32> -> vector<2x8xf32>
    %cst_6 = arith.constant 0.000000e+00 : f32
    %6 = vector.broadcast %cst_6 : f32 to vector<2x8xf32>
    %7 = arith.maximumf %5, %6 : vector<2x8xf32>
    %c0_7 = arith.constant 0 : index
    %c0_8 = arith.constant 0 : index
    %8 = vector.load %arg3[%c0_7, %c0_8] : memref<8x32xf32, #tpu.memory_space<vmem>>, vector<8x32xf32>
    %cst_9 = arith.constant dense<0.000000e+00> : vector<2x32xf32>
    %9 = tpu.matmul %7, %8, %cst_9 {dimension_numbers = #tpu.dot_dimension_numbers<[1], [0], [0], [1], [0, 0, 1, 1], [], []>} : vector<2x8xf32>, vector<8x32xf32>, vector<2x32xf32> -> vector<2x32xf32>
    %cst_10 = arith.constant 3.000000e+00 : f32
    %10 = vector.broadcast %cst_10 : f32 to vector<2x32xf32>
    %11 = arith.addf %9, %10 : vector<2x32xf32>
    %cst_11 = arith.constant 0.000000e+00 : f32
    %cst_12 = arith.constant 6.000000e+00 : f32
    %12 = vector.broadcast %cst_11 : f32 to vector<2x32xf32>
    %13 = arith.maximumf %12, %11 : vector<2x32xf32>
    %14 = vector.broadcast %cst_12 : f32 to vector<2x32xf32>
    %15 = arith.minimumf %14, %13 : vector<2x32xf32>
    %cst_13 = arith.constant 0.166666672 : f32
    %16 = vector.broadcast %cst_13 : f32 to vector<2x32xf32>
    %17 = arith.mulf %15, %16 : vector<2x32xf32>
    %18 = vector.shape_cast %17 : vector<2x32xf32> to vector<2x1x32xf32>
    %19 = vector.broadcast %18 : vector<2x1x32xf32> to vector<2x64x32xf32>
    %20 = arith.mulf %0, %19 : vector<2x64x32xf32>
    %c0_14 = arith.constant 0 : index
    %c0_15 = arith.constant 0 : index
    %c0_16 = arith.constant 0 : index
    %21 = vector.load %arg4[%c0_14, %c0_15, %c0_16] : memref<2x64x32xf32, #tpu.memory_space<vmem>>, vector<2x64x32xf32>
    tpu.vector_store %arg4[%c0_14, %c0_15, %c0_16], %20 {strides = array<i32>} : memref<2x64x32xf32, #tpu.memory_space<vmem>>, vector<2x64x32xf32>,
    return
  }
  func.func @transform_0(%arg0: i32) -> (i32, i32, i32) {
    %c0_i32 = arith.constant 0 : i32
    %c0_i32_0 = arith.constant 0 : i32
    %c0_i32_1 = arith.constant 0 : i32
    return %arg0, %c0_i32, %c0_i32_0 : i32, i32, i32
  }
  func.func @transform_1(%arg0: i32) -> (i32, i32) {
    %c0_i32 = arith.constant 0 : i32
    %c0_i32_0 = arith.constant 0 : i32
    %c0_i32_1 = arith.constant 0 : i32
    return %c0_i32, %c0_i32_0 : i32, i32
  }
  func.func @transform_2(%arg0: i32) -> (i32, i32) {
    %c0_i32 = arith.constant 0 : i32
    %c0_i32_0 = arith.constant 0 : i32
    %c0_i32_1 = arith.constant 0 : i32
    return %c0_i32, %c0_i32_0 : i32, i32
  }
  func.func @transform_3(%arg0: i32) -> (i32, i32, i32) {
    %c0_i32 = arith.constant 0 : i32
    %c0_i32_0 = arith.constant 0 : i32
    %c0_i32_1 = arith.constant 0 : i32
    return %arg0, %c0_i32, %c0_i32_0 : i32, i32, i32
  }
}

</mosaic_0001>

<llo_original>
// kernel: tpu_custom_call.1
$region0: #{tpu_custom_call.1}
  #allocation0 [shape = 'u32[]', space=smem, size = 0x4, offset = 0x4, fixed_abs, tag = 'smem constant byte address 0x4 - core index']
  #allocation1 [shape = 'u32[144,128]{1,0:T(1,128)}', space=vmem, size = 0x12000, scoped, tag = 'internal scratch']
  %s0 = inlined_call_operand.vmem [shape: f32[2,64,32], index: 0, kind: input, shape index: {}]
  %s1 = inlined_call_operand.vmem [shape: f32[32,8], index: 1, kind: input, shape index: {}]
  %s2 = inlined_call_operand.vmem [shape: f32[8,32], index: 2, kind: input, shape index: {}]
  %s3 = inlined_call_operand.vmem [shape: f32[2,64,32], index: 3, kind: output, shape index: {}]
  %s4 = sld [smem:[#allocation0]]
  $region22: #{tpu_custom_call.1} parent=0
    _
  %s6 = ssub.s32 1, %s4
  %s7 = scalar_select 0, %s6, %s4
  // Predicated region
  $region2: #{tpu_custom_call.1} parent=0 // pred_check
    _
  $region3: #{tpu_custom_call.1} parent=0 // pred_check_branch
    %9 = sbr.rel (0) target = $region5
  $region4: #{tpu_custom_call.1} parent=0 // pred_region
    _
  $region5: #{tpu_custom_call.1} parent=0 // pred_fallthru
    _
  // Predicated region
  $region6: #{tpu_custom_call.1} parent=0 // pred_check
    _
  $region7: #{tpu_custom_call.1} parent=0 // pred_check_branch
    %11 = sbr.rel (0) target = $region9
  $region8: #{tpu_custom_call.1} parent=0 // pred_region
    _
  $region9: #{tpu_custom_call.1} parent=0 // pred_fallthru
    _
  // Predicated region
  $region10: #{tpu_custom_call.1} parent=0 // pred_check
    _
  $region11: #{tpu_custom_call.1} parent=0 // pred_check_branch
    %13 = sbr.rel (0) target = $region13
  $region12: #{tpu_custom_call.1} parent=0 // pred_region
    _
  $region13: #{tpu_custom_call.1} parent=0 // pred_fallthru
    _
  %v14 = vld [vmem:[%s0] sm:$0xff]
  %v15 = vld [vmem:[%s0 + $0x8] sm:$0xff]
  %v16 = vld [vmem:[%s0 + $0x10] sm:$0xff]
  %v17 = vld [vmem:[%s0 + $0x18] sm:$0xff]
  %v18 = vld [vmem:[%s0 + $0x20] sm:$0xff]
  %v19 = vld [vmem:[%s0 + $0x28] sm:$0xff]
  %v20 = vld [vmem:[%s0 + $0x30] sm:$0xff]
  %v21 = vld [vmem:[%s0 + $0x38] sm:$0xff]
  %v22 = vld [vmem:[%s0 + $0x40] sm:$0xff]
  %v23 = vld [vmem:[%s0 + $0x48] sm:$0xff]
  %v24 = vld [vmem:[%s0 + $0x50] sm:$0xff]
  %v25 = vld [vmem:[%s0 + $0x58] sm:$0xff]
  %v26 = vld [vmem:[%s0 + $0x60] sm:$0xff]
  %v27 = vld [vmem:[%s0 + $0x68] sm:$0xff]
  %v28 = vld [vmem:[%s0 + $0x70] sm:$0xff]
  %v29 = vld [vmem:[%s0 + $0x78] sm:$0xff]
  %vm30 = vcmask 261120
  %v31 = vsel %vm30, %v14, 0.0
  %v32 = vsel %vm30, %v15, 0.0
  %v33 = vadd.f32 %v31, %v32
  %v34 = vsel %vm30, %v16, 0.0
  %v35 = vadd.f32 %v33, %v34
  %v36 = vsel %vm30, %v17, 0.0
  %v37 = vadd.f32 %v35, %v36
  %v38 = vsel %vm30, %v18, 0.0
  %v39 = vadd.f32 %v37, %v38
  %v40 = vsel %vm30, %v19, 0.0
  %v41 = vadd.f32 %v39, %v40
  %v42 = vsel %vm30, %v20, 0.0
  %v43 = vadd.f32 %v41, %v42
  %v44 = vsel %vm30, %v21, 0.0
  %v45 = vadd.f32 %v43, %v44
  %v46 = vrot.slane %v45, 4
  %v47 = vadd.f32 %v45, %v46
  %v48 = vrot.slane %v47, 2
  %v49 = vadd.f32 %v47, %v48
  %v50 = vrot.slane %v49, 1
  %v51 = vadd.f32 %v49, %v50
  %v52 = vsel %vm30, %v22, 0.0
  %v53 = vsel %vm30, %v23, 0.0
  %v54 = vadd.f32 %v52, %v53
  %v55 = vsel %vm30, %v24, 0.0
  %v56 = vadd.f32 %v54, %v55
  %v57 = vsel %vm30, %v25, 0.0
  %v58 = vadd.f32 %v56, %v57
  %v59 = vsel %vm30, %v26, 0.0
  %v60 = vadd.f32 %v58, %v59
  %v61 = vsel %vm30, %v27, 0.0
  %v62 = vadd.f32 %v60, %v61
  %v63 = vsel %vm30, %v28, 0.0
  %v64 = vadd.f32 %v62, %v63
  %v65 = vsel %vm30, %v29, 0.0
  %v66 = vadd.f32 %v64, %v65
  %v67 = vrot.slane %v66, 4
  %v68 = vadd.f32 %v66, %v67
  %v69 = vrot.slane %v68, 2
  %v70 = vadd.f32 %v68, %v69
  %v71 = vrot.slane %v70, 1
  %v72 = vadd.f32 %v70, %v71
  %v73 = vmul.f32 %v51, 0.015625
  %v74 = vmul.f32 %v72, 0.015625
  %v75 = vld [vmem:[%s1] sm:$0xff]
  %v76 = vld [vmem:[%s1 + $0x8] sm:$0xff]
  %v77 = vld [vmem:[%s1 + $0x10] sm:$0xff]
  %v78 = vld [vmem:[%s1 + $0x18] sm:$0xff]
  %vm81 = vcmask 1041409
  %v82 = vsel %vm81, %v74, %v73
  %v83 = vsel %vm30, %v82, 0
  %85 = vmatprep.subr.mxu0 0.0
  %86 = vmatpush1.msra.mxu0 0.0
  %87 = vmatprep.subr.mxu0 0.0
  %88 = vmatpush1.msra.mxu0 0.0
  %89 = vmatprep.subr.mxu0 0.0
  %90 = vmatpush1.msra.mxu0 0.0
  %91 = vmatprep.subr.mxu0 0.0
  %92 = vmatpush1.msra.mxu0 0.0
  %93 = vmatprep.subr.mxu0 0.0
  %94 = vmatpush1.msra.mxu0 0.0
  %95 = vmatprep.subr.mxu0 0.0
  %96 = vmatpush1.msra.mxu0 0.0
  %97 = vmatprep.subr.mxu0 0.0
  %98 = vmatpush1.msra.mxu0 0.0
  %99 = vmatprep.subr.mxu0 0.0
  %100 = vmatpush1.msra.mxu0 0.0
  %101 = vmatprep.subr.mxu0 0.0
  %102 = vmatpush1.msra.mxu0 0.0
  %103 = vmatprep.subr.mxu0 0.0
  %104 = vmatpush1.msra.mxu0 0.0
  %105 = vmatprep.subr.mxu0 0.0
  %106 = vmatpush1.msra.mxu0 0.0
  %107 = vmatprep.subr.mxu0 0.0
  %108 = vmatpush1.msra.mxu0 0.0
  %109 = vmatprep.subr.mxu0 0.0
  %110 = vmatpush1.msra.mxu0 %v78
  %111 = vmatprep.subr.mxu0 0.0
  %112 = vmatpush1.msra.mxu0 %v77
  %113 = vmatprep.subr.mxu0 0.0
  %114 = vmatpush1.msra.mxu0 %v76
  %115 = vmatprep.subr.mxu0 0.0
  %116 = vmatpush1.msra.mxu0 %v75
  %117 = vmatprep.subr.mxu0 0.0
  %118 = vmatpush2.msra.mxu0 0.0
  %119 = vmatprep.subr.mxu0 0.0
  %120 = vmatpush2.msra.mxu0 0.0
  %121 = vmatprep.subr.mxu0 0.0
  %122 = vmatpush2.msra.mxu0 0.0
  %123 = vmatprep.subr.mxu0 0.0
  %124 = vmatpush2.msra.mxu0 0.0
  %125 = vmatprep.subr.mxu0 0.0
  %126 = vmatpush2.msra.mxu0 0.0
  %127 = vmatprep.subr.mxu0 0.0
  %128 = vmatpush2.msra.mxu0 0.0
  %129 = vmatprep.subr.mxu0 0.0
  %130 = vmatpush2.msra.mxu0 0.0
  %131 = vmatprep.subr.mxu0 0.0
  %132 = vmatpush2.msra.mxu0 0.0
  %133 = vmatprep.subr.mxu0 0.0
  %134 = vmatpush2.msra.mxu0 0.0
  %135 = vmatprep.subr.mxu0 0.0
  %136 = vmatpush2.msra.mxu0 0.0
  %137 = vmatprep.subr.mxu0 0.0
  %138 = vmatpush2.msra.mxu0 0.0
  %139 = vmatprep.subr.mxu0 0.0
  %140 = vmatpush2.msra.mxu0 0.0
  %141 = vmatprep.subr.mxu0 0.0
  %142 = vmatpush2.msra.mxu0 0.0
  %143 = vmatprep.subr.mxu0 0.0
  %144 = vmatpush2.msra.mxu0 0.0
  %145 = vmatprep.subr.mxu0 0.0
  %146 = vmatpush2.msra.mxu0 0.0
  %147 = vmatprep.subr.mxu0 0.0
  %148 = vmatpush2.msra.mxu0 0.0
  %149 = vmatprep.mubr.f32.mxu0 0.0
  %150 = vmatmul.mubr.f32.gmra.mxu0 %v83
  %v151 = vpop.f32.mrf.mxu0
  %v152 = vadd.f32 0.0, %v151
  %v153 = vpop.f32.mrf.mxu0
  %154 = vdwg.mxu0
  %v155 = vmax.f32 %v152, 0.0
  %v156 = vld [vmem:[%s2] sm:$0xff]
  %vm157 = vcmask 64512
  %v159 = vsel %vm157, %v155, 0
  %161 = vmatprep.subr.mxu0 0.0
  %162 = vmatpush1.msra.mxu0 0.0
  %163 = vmatprep.subr.mxu0 0.0
  %164 = vmatpush1.msra.mxu0 0.0
  %165 = vmatprep.subr.mxu0 0.0
  %166 = vmatpush1.msra.mxu0 0.0
  %167 = vmatprep.subr.mxu0 0.0
  %168 = vmatpush1.msra.mxu0 0.0
  %169 = vmatprep.subr.mxu0 0.0
  %170 = vmatpush1.msra.mxu0 0.0
  %171 = vmatprep.subr.mxu0 0.0
  %172 = vmatpush1.msra.mxu0 0.0
  %173 = vmatprep.subr.mxu0 0.0
  %174 = vmatpush1.msra.mxu0 0.0
  %175 = vmatprep.subr.mxu0 0.0
  %176 = vmatpush1.msra.mxu0 0.0
  %177 = vmatprep.subr.mxu0 0.0
  %178 = vmatpush1.msra.mxu0 0.0
  %179 = vmatprep.subr.mxu0 0.0
  %180 = vmatpush1.msra.mxu0 0.0
  %181 = vmatprep.subr.mxu0 0.0
  %182 = vmatpush1.msra.mxu0 0.0
  %183 = vmatprep.subr.mxu0 0.0
  %184 = vmatpush1.msra.mxu0 0.0
  %185 = vmatprep.subr.mxu0 0.0
  %186 = vmatpush1.msra.mxu0 0.0
  %187 = vmatprep.subr.mxu0 0.0
  %188 = vmatpush1.msra.mxu0 0.0
  %189 = vmatprep.subr.mxu0 0.0
  %190 = vmatpush1.msra.mxu0 0.0
  %191 = vmatprep.subr.mxu0 0.0
  %192 = vmatpush1.msra.mxu0 %v156
  %193 = vmatprep.subr.mxu0 0.0
  %194 = vmatpush2.msra.mxu0 0.0
  %195 = vmatprep.subr.mxu0 0.0
  %196 = vmatpush2.msra.mxu0 0.0
  %197 = vmatprep.subr.mxu0 0.0
  %198 = vmatpush2.msra.mxu0 0.0
  %199 = vmatprep.subr.mxu0 0.0
  %200 = vmatpush2.msra.mxu0 0.0
  %201 = vmatprep.subr.mxu0 0.0
  %202 = vmatpush2.msra.mxu0 0.0
  %203 = vmatprep.subr.mxu0 0.0
  %204 = vmatpush2.msra.mxu0 0.0
  %205 = vmatprep.subr.mxu0 0.0
  %206 = vmatpush2.msra.mxu0 0.0
  %207 = vmatprep.subr.mxu0 0.0
  %208 = vmatpush2.msra.mxu0 0.0
  %209 = vmatprep.subr.mxu0 0.0
  %210 = vmatpush2.msra.mxu0 0.0
  %211 = vmatprep.subr.mxu0 0.0
  %212 = vmatpush2.msra.mxu0 0.0
  %213 = vmatprep.subr.mxu0 0.0
  %214 = vmatpush2.msra.mxu0 0.0
  %215 = vmatprep.subr.mxu0 0.0
  %216 = vmatpush2.msra.mxu0 0.0
  %217 = vmatprep.subr.mxu0 0.0
  %218 = vmatpush2.msra.mxu0 0.0
  %219 = vmatprep.subr.mxu0 0.0
  %220 = vmatpush2.msra.mxu0 0.0
  %221 = vmatprep.subr.mxu0 0.0
  %222 = vmatpush2.msra.mxu0 0.0
  %223 = vmatprep.subr.mxu0 0.0
  %224 = vmatpush2.msra.mxu0 0.0
  %225 = vmatprep.mubr.f32.mxu0 0.0
  %226 = vmatmul.mubr.f32.gmra.mxu0 %v159
  %v227 = vpop.f32.mrf.mxu0
  %v228 = vadd.f32 3.0, %v227
  %v229 = vpop.f32.mrf.mxu0
  %230 = vdwg.mxu0
  %v231 = vmax.f32 %v228, 0.0
  %v232 = vmin.f32 %v231, 6.0
  %v233 = vmul.f32 %v232, 0.16666667
  %v236 = vunpack.c.l.s4 1966171168
  %v237 = vunpack.c.0.s8 %v236
  %v238 = vlaneseq
  %v239 = vshrl.u32 %v238, 7
  %v240 = vsub.s32 %v237, %v239
  %v241 = vrot.slane %v233, %v240
  %v242 = vcombine.high %v241, %v241
  %v244 = vunpack.c.l.s4 1966171168
  %v245 = vunpack.c.0.s8 %v244
  %v246 = vlaneseq
  %v247 = vshrl.u32 %v246, 7
  %v248 = vsub.s32 %v245, %v247
  %v249 = vrot.slane %v241, %v248
  %v251 = vunpack.c.l.s4 1966171168
  %v252 = vunpack.c.0.s8 %v251
  %v253 = vlaneseq
  %v254 = vshrl.u32 %v253, 7
  %v255 = vsub.s32 %v252, %v254
  %v256 = vrot.slane %v242, %v255
  %v257 = vlaneseq
  %v258 = vshrl.u32 %v257, 7
  %v259 = vsub.s32 0, %v258
  %v260 = vrot.slane %v249, %v259
  %v261 = vlaneseq
  %v262 = vshrl.u32 %v261, 7
  %v263 = vsub.s32 0, %v262
  %v264 = vrot.slane %v256, %v263
  %v267 = vmul.f32 %v14, %v260
  %v268 = vmul.f32 %v15, %v260
  %v269 = vmul.f32 %v16, %v260
  %v270 = vmul.f32 %v17, %v260
  %v271 = vmul.f32 %v18, %v260
  %v272 = vmul.f32 %v19, %v260
  %v273 = vmul.f32 %v20, %v260
  %v274 = vmul.f32 %v21, %v260
  %v275 = vmul.f32 %v22, %v264
  %v276 = vmul.f32 %v23, %v264
  %v277 = vmul.f32 %v24, %v264
  %v278 = vmul.f32 %v25, %v264
  %v279 = vmul.f32 %v26, %v264
  %v280 = vmul.f32 %v27, %v264
  %v281 = vmul.f32 %v28, %v264
  %v282 = vmul.f32 %v29, %v264
  %283 = vst.msk [vmem:[%s3] sm:$0xff] %vm30, %v267
  %284 = vst.msk [vmem:[%s3 + $0x8] sm:$0xff] %vm30, %v268
  %285 = vst.msk [vmem:[%s3 + $0x10] sm:$0xff] %vm30, %v269
  %286 = vst.msk [vmem:[%s3 + $0x18] sm:$0xff] %vm30, %v270
  %287 = vst.msk [vmem:[%s3 + $0x20] sm:$0xff] %vm30, %v271
  %288 = vst.msk [vmem:[%s3 + $0x28] sm:$0xff] %vm30, %v272
  %289 = vst.msk [vmem:[%s3 + $0x30] sm:$0xff] %vm30, %v273
  %290 = vst.msk [vmem:[%s3 + $0x38] sm:$0xff] %vm30, %v274
  %291 = vst.msk [vmem:[%s3 + $0x40] sm:$0xff] %vm30, %v275
  %292 = vst.msk [vmem:[%s3 + $0x48] sm:$0xff] %vm30, %v276
  %293 = vst.msk [vmem:[%s3 + $0x50] sm:$0xff] %vm30, %v277
  %294 = vst.msk [vmem:[%s3 + $0x58] sm:$0xff] %vm30, %v278
  %295 = vst.msk [vmem:[%s3 + $0x60] sm:$0xff] %vm30, %v279
  %296 = vst.msk [vmem:[%s3 + $0x68] sm:$0xff] %vm30, %v280
  %297 = vst.msk [vmem:[%s3 + $0x70] sm:$0xff] %vm30, %v281
  %298 = vst.msk [vmem:[%s3 + $0x78] sm:$0xff] %vm30, %v282
  // Predicated region
  $region14: #{tpu_custom_call.1} parent=0 // pred_check
    _
  $region15: #{tpu_custom_call.1} parent=0 // pred_check_branch
    %300 = sbr.rel (0) target = $region17
  $region16: #{tpu_custom_call.1} parent=0 // pred_region
    _
  $region17: #{tpu_custom_call.1} parent=0 // pred_fallthru
    _
  // Predicated region
  $region18: #{tpu_custom_call.1} parent=0 // pred_check
    _
  $region19: #{tpu_custom_call.1} parent=0 // pred_check_branch
    %302 = sbr.rel (0) target = $region21
  $region20: #{tpu_custom_call.1} parent=0 // pred_region
    _
  $region21: #{tpu_custom_call.1} parent=0 // pred_fallthru
    _

</llo_original>
